<compile_context>
chip_gen: v7x
topology: tpu7x:2x2x1
jax: 0.10.0
libtpu: 0.0.40
codegen_flags: <defaults>
</compile_context>

<pallas_src>
import jax
import jax.numpy as jnp
from jax.experimental import pallas as pl
from jax.experimental.pallas import tpu as pltpu

IN_FEATURES = 1000
HIDDEN = 32
OUT_FEATURES = 2


def mlp_kernel(x_ref, w1_ref, b1_ref, w2_ref, b2_ref, o_ref):
    # lin1 + relu: (tm, 1000) f32 activation tile against the resident (1000, 32)
    # weight; f32 accumulation.  Compute is tiny vs. the x DMA, so MXU shape /
    # remainder masking on the 1000-wide contraction is irrelevant.
    h = jnp.dot(x_ref[...], w1_ref[...], preferred_element_type=jnp.float32)
    h = jnp.maximum(h + b1_ref[...], 0.0)
    # lin2 (32 -> 2): rides in the slack of the DMA-bound step.
    y = jnp.dot(h, w2_ref[...], preferred_element_type=jnp.float32) + b2_ref[...]
    o_ref[...] = y.astype(o_ref.dtype)


def _round_up(a, m):
    return ((a + m - 1) // m) * m


def net_forward(x, w1t, b1, w2t, b2, *, tm=None):
    """y = relu(x @ w1t + b1) @ w2t + b2 with x: (B, 1000) f32."""
    B = x.shape[0]
    if tm is None:
        if B <= 256:
            tm = max(8, _round_up(B, 8))                 # single tile, sublane-aligned
        else:
            # >= 2 grid steps so v7x's two TensorCores both get a batch slice,
            # capped at 1024 rows per tile.
            tm = min(1024, _round_up(pl.cdiv(B, 2), 8))
    grid = (pl.cdiv(B, tm),)   # ragged last tile: OOB rows are discarded on store

    b1_2d = b1.reshape(1, HIDDEN).astype(jnp.float32)
    b2_2d = b2.reshape(1, OUT_FEATURES).astype(jnp.float32)

    cost = pl.CostEstimate(
        flops=2 * B * IN_FEATURES * HIDDEN + 2 * B * HIDDEN * OUT_FEATURES,
        transcendentals=0,
        bytes_accessed=(x.size * 4 + w1t.size * 4 + w2t.size * 4
                        + (b1_2d.size + b2_2d.size) * 4
                        + B * OUT_FEATURES * 4),
    )

    return pl.pallas_call(
        mlp_kernel,
        out_shape=jax.ShapeDtypeStruct((B, OUT_FEATURES), jnp.float32),
        grid_spec=pltpu.PrefetchScalarGridSpec(
            num_scalar_prefetch=0,
            grid=grid,
            in_specs=[
                # x batch-tiled; last dim equals the full array dim (1000), so no
                # host-side K padding / casting pass is needed.
                pl.BlockSpec((tm, IN_FEATURES), lambda i: (i, 0)),
                # Parameters resident in VMEM across all grid steps (~128 KiB).
                pl.BlockSpec((IN_FEATURES, HIDDEN), lambda i: (0, 0)),
                pl.BlockSpec((1, HIDDEN), lambda i: (0, 0)),
                pl.BlockSpec((HIDDEN, OUT_FEATURES), lambda i: (0, 0)),
                pl.BlockSpec((1, OUT_FEATURES), lambda i: (0, 0)),
            ],
            # True-width output (last dim = full array dim 2): no 128-lane padding
            # and no downstream slice pass over HBM.
            out_specs=pl.BlockSpec((tm, OUT_FEATURES), lambda i: (i, 0)),
        ),
        compiler_params=pltpu.CompilerParams(
            dimension_semantics=("parallel",),   # megacore sharding on v7x
            vmem_limit_bytes=64 << 20,           # headroom for tm sweeps (v5e default is 16 MiB)
        ),
        cost_estimate=cost,
    )(x, w1t, b1_2d, w2t, b2_2d)


def init_params(key):
    # nn.Linear(1000, 32): weight filled with 0 in __init__ (fill_(0) on lin1).
    # Biases and lin2 params keep the PyTorch default uniform init.
    k1, k2, k3 = jax.random.split(key, 3)

    w1 = jnp.zeros((HIDDEN, IN_FEATURES), dtype=jnp.float32)               # lin1.weight.fill_(0)
    bound1 = 1.0 / float(jnp.sqrt(jnp.float32(IN_FEATURES)))
    b1 = jax.random.uniform(k1, (HIDDEN,), jnp.float32, -bound1, bound1)   # lin1.bias

    bound2 = 1.0 / float(jnp.sqrt(jnp.float32(HIDDEN)))
    w2 = jax.random.uniform(k2, (OUT_FEATURES, HIDDEN), jnp.float32, -bound2, bound2)  # lin2.weight
    b2 = jax.random.uniform(k3, (OUT_FEATURES,), jnp.float32, -bound2, bound2)         # lin2.bias

    # Pre-transposed so the kernel computes x @ w1t and h @ w2t.
    return w1.T, b1, w2.T, b2


if __name__ == "__main__":
    key = jax.random.PRNGKey(0)
    kx, kp = jax.random.split(key)

    B = 8
    x = jax.random.normal(kx, (B, IN_FEATURES), dtype=jnp.float32)
    w1t, b1, w2t, b2 = init_params(kp)

    y = net_forward(x, w1t, b1, w2t, b2)
    jax.block_until_ready(y)

    # Pure-JAX f32 reference matching the PyTorch forward exactly.
    ref = jnp.maximum(x @ w1t + b1[None, :], 0.0) @ w2t + b2[None, :]

    assert y.shape == (B, OUT_FEATURES)
    assert jnp.allclose(y, ref, atol=1e-4, rtol=1e-4)

    print("KERNEL_OK")
</pallas_src>

<mosaic_0001>
module attributes {stable_mosaic.version = 11 : i64} {
  func.func @mlp_kernel(%arg0: i32, %arg1: memref<8x1000xf32, #tpu.memory_space<vmem>>, %arg2: memref<1000x32xf32, #tpu.memory_space<vmem>>, %arg3: memref<1x32xf32, #tpu.memory_space<vmem>>, %arg4: memref<32x2xf32, #tpu.memory_space<vmem>>, %arg5: memref<1x2xf32, #tpu.memory_space<vmem>>, %arg6: memref<8x2xf32, #tpu.memory_space<vmem>>) attributes {dimension_semantics = [#tpu.dimension_semantics<parallel>], iteration_bounds = array<i64: 1>, scalar_prefetch = 0 : i64, scratch_operands = 0 : i64, tpu.core_type = #tpu.core_type<tc>, window_params = [{transform_indices = @transform_0, window_bounds = array<i64: 8, 1000>}, {pipeline_mode = #tpu.pipeline_mode<synchronous>, transform_indices = @transform_1, window_bounds = array<i64: 1000, 32>}, {pipeline_mode = #tpu.pipeline_mode<synchronous>, transform_indices = @transform_2, window_bounds = array<i64: 1, 32>}, {pipeline_mode = #tpu.pipeline_mode<synchronous>, transform_indices = @transform_3, window_bounds = array<i64: 32, 2>}, {pipeline_mode = #tpu.pipeline_mode<synchronous>, transform_indices = @transform_4, window_bounds = array<i64: 1, 2>}, {transform_indices = @transform_5, window_bounds = array<i64: 8, 2>}]} {
    %c0 = arith.constant 0 : index
    %c0_0 = arith.constant 0 : index
    %0 = vector.load %arg1[%c0, %c0_0] : memref<8x1000xf32, #tpu.memory_space<vmem>>, vector<8x1000xf32>
    %c0_1 = arith.constant 0 : index
    %c0_2 = arith.constant 0 : index
    %1 = vector.load %arg2[%c0_1, %c0_2] : memref<1000x32xf32, #tpu.memory_space<vmem>>, vector<1000x32xf32>
    %cst = arith.constant dense<0.000000e+00> : vector<8x32xf32>
    %2 = tpu.matmul %0, %1, %cst {dimension_numbers = #tpu.dot_dimension_numbers<[1], [0], [0], [1], [0, 0, 1, 1], [], []>} : vector<8x1000xf32>, vector<1000x32xf32>, vector<8x32xf32> -> vector<8x32xf32>
    %c0_3 = arith.constant 0 : index
    %c0_4 = arith.constant 0 : index
    %3 = vector.load %arg3[%c0_3, %c0_4] : memref<1x32xf32, #tpu.memory_space<vmem>>, vector<1x32xf32>
    %4 = vector.broadcast %3 : vector<1x32xf32> to vector<8x32xf32>
    %5 = arith.addf %2, %4 : vector<8x32xf32>
    %cst_5 = arith.constant 0.000000e+00 : f32
    %6 = vector.broadcast %cst_5 : f32 to vector<8x32xf32>
    %7 = arith.maximumf %5, %6 : vector<8x32xf32>
    %c0_6 = arith.constant 0 : index
    %c0_7 = arith.constant 0 : index
    %8 = vector.load %arg4[%c0_6, %c0_7] : memref<32x2xf32, #tpu.memory_space<vmem>>, vector<32x2xf32>
    %cst_8 = arith.constant dense<0.000000e+00> : vector<8x2xf32>
    %9 = tpu.matmul %7, %8, %cst_8 {dimension_numbers = #tpu.dot_dimension_numbers<[1], [0], [0], [1], [0, 0, 1, 1], [], []>} : vector<8x32xf32>, vector<32x2xf32>, vector<8x2xf32> -> vector<8x2xf32>
    %c0_9 = arith.constant 0 : index
    %c0_10 = arith.constant 0 : index
    %10 = vector.load %arg5[%c0_9, %c0_10] : memref<1x2xf32, #tpu.memory_space<vmem>>, vector<1x2xf32>
    %11 = vector.broadcast %10 : vector<1x2xf32> to vector<8x2xf32>
    %12 = arith.addf %9, %11 : vector<8x2xf32>
    %c0_11 = arith.constant 0 : index
    %c0_12 = arith.constant 0 : index
    %13 = vector.load %arg6[%c0_11, %c0_12] : memref<8x2xf32, #tpu.memory_space<vmem>>, vector<8x2xf32>
    tpu.vector_store %arg6[%c0_11, %c0_12], %12 {strides = array<i32>} : memref<8x2xf32, #tpu.memory_space<vmem>>, vector<8x2xf32>,
    return
  }
  func.func @transform_0(%arg0: i32) -> (i32, i32) {
    %c0_i32 = arith.constant 0 : i32
    %c0_i32_0 = arith.constant 0 : i32
    return %arg0, %c0_i32 : i32, i32
  }
  func.func @transform_1(%arg0: i32) -> (i32, i32) {
    %c0_i32 = arith.constant 0 : i32
    %c0_i32_0 = arith.constant 0 : i32
    %c0_i32_1 = arith.constant 0 : i32
    return %c0_i32, %c0_i32_0 : i32, i32
  }
  func.func @transform_2(%arg0: i32) -> (i32, i32) {
    %c0_i32 = arith.constant 0 : i32
    %c0_i32_0 = arith.constant 0 : i32
    %c0_i32_1 = arith.constant 0 : i32
    return %c0_i32, %c0_i32_0 : i32, i32
  }
  func.func @transform_3(%arg0: i32) -> (i32, i32) {
    %c0_i32 = arith.constant 0 : i32
    %c0_i32_0 = arith.constant 0 : i32
    %c0_i32_1 = arith.constant 0 : i32
    return %c0_i32, %c0_i32_0 : i32, i32
  }
  func.func @transform_4(%arg0: i32) -> (i32, i32) {
    %c0_i32 = arith.constant 0 : i32
    %c0_i32_0 = arith.constant 0 : i32
    %c0_i32_1 = arith.constant 0 : i32
    return %c0_i32, %c0_i32_0 : i32, i32
  }
  func.func @transform_5(%arg0: i32) -> (i32, i32) {
    %c0_i32 = arith.constant 0 : i32
    %c0_i32_0 = arith.constant 0 : i32
    return %arg0, %c0_i32 : i32, i32
  }
}

</mosaic_0001>

<llo_original>
// kernel: tpu_custom_call.1
$region0: #{tpu_custom_call.1}
  #allocation0 [shape = 'u32[]', space=smem, size = 0x4, offset = 0x4, fixed_abs, tag = 'smem constant byte address 0x4 - core index']
  #allocation1 [shape = 'u32[144,128]{1,0:T(1,128)}', space=vmem, size = 0x12000, scoped, tag = 'internal scratch']
  %s0 = inlined_call_operand.hbm [shape: f32[8,1000], index: 0, kind: input, shape index: {}]
  %s1 = inlined_call_operand.hbm [shape: f32[1000,32], index: 1, kind: input, shape index: {}]
  %s2 = inlined_call_operand.hbm [shape: f32[1,32], index: 2, kind: input, shape index: {}]
  %s3 = inlined_call_operand.hbm [shape: f32[32,2], index: 3, kind: input, shape index: {}]
  %s4 = inlined_call_operand.hbm [shape: f32[1,2], index: 4, kind: input, shape index: {}]
  %s5 = inlined_call_operand.hbm [shape: f32[8,2], index: 5, kind: output, shape index: {}]
  %s6 = sld [smem:[#allocation0]]
  $region50: #{tpu_custom_call.1} parent=0
    _
  %s8 = ssub.s32 1, %s6
  %s9 = scalar_select 0, %s8, %s6
  $region1: #{tpu_custom_call.1} parent=0
    #allocation2 [shape = 'u8[32768]{0}', space=vmem, size = 0x8000, scoped, tag = 'input window, operand 0, single buffered']
    #allocation3 [shape = 's32[1]{0}', space=sflag, size = 0x4, scoped, tag = 'scoped memory for tpu_custom_call.1']
    #allocation4 [shape = 's32[1]{0}', space=sflag, size = 0x4, scoped, tag = 'scoped memory for tpu_custom_call.1']
    #allocation5 [shape = 'u8[512000]{0}', space=vmem, size = 0x7d000, scoped, tag = 'input window, operand 1, single buffered']
    #allocation6 [shape = 's32[1]{0}', space=sflag, size = 0x4, scoped, tag = 'scoped memory for tpu_custom_call.1']
    #allocation7 [shape = 'u8[512]{0}', space=vmem, size = 0x400, scoped, tag = 'input window, operand 2, single buffered']
    #allocation8 [shape = 'u8[16384]{0}', space=vmem, size = 0x4000, scoped, tag = 'input window, operand 3, single buffered']
    #allocation9 [shape = 's32[1]{0}', space=sflag, size = 0x4, scoped, tag = 'scoped memory for tpu_custom_call.1']
    #allocation10 [shape = 'u8[512]{0}', space=vmem, size = 0x400, scoped, tag = 'input window, operand 4, single buffered']
    #allocation11 [shape = 'u8[4096]{0}', space=vmem, size = 0x1000, scoped, tag = 'output window, operand 0, single buffered']
    %10 = vsyncpa [#allocation3], 0
    %11 = vsyncpa [#allocation6], 0
    %12 = vsyncpa [#allocation9], 0
    %13 = vsyncpa [#allocation4], 0
    // Predicated region
    $region2: #{tpu_custom_call.1} parent=1 // pred_check
      _
    $region3: #{tpu_custom_call.1} parent=1 // pred_check_branch
      %15 = sbr.rel (0) target = $region5
    $region4: #{tpu_custom_call.1} parent=1 // pred_region
      %s17 = ssub.s32 1024, 1024
      %18 = vsyncadd [#allocation3], %s17
      %s20 = sshll.u32 [#allocation2], 4
      %s21 = int_to_ptr.vmem [resolvable:$true] %s20
      %23 = dma.hbm_to_vmem [thread:$0]  %s0, 1024, %s21, [#allocation3]
    $region5: #{tpu_custom_call.1} parent=1 // pred_fallthru
      _
    // Predicated region
    $region6: #{tpu_custom_call.1} parent=1 // pred_check
      _
    $region7: #{tpu_custom_call.1} parent=1 // pred_check_branch
      %25 = sbr.rel (0) target = $region9
    $region8: #{tpu_custom_call.1} parent=1 // pred_region
      %s27 = ssub.s32 16000, 16000
      %28 = vsyncadd [#allocation6], %s27
      %s29 = sshll.u32 [#allocation5], 4
      %s30 = int_to_ptr.vmem [resolvable:$true] %s29
      %35 = dma.hbm_to_vmem [thread:$0]  %s1, 16000, %s30, [#allocation6], 128, 128, 8
    $region9: #{tpu_custom_call.1} parent=1 // pred_fallthru
      _
    // Predicated region
    $region10: #{tpu_custom_call.1} parent=1 // pred_check
      _
    $region11: #{tpu_custom_call.1} parent=1 // pred_check_branch
      %37 = sbr.rel (0) target = $region13
    $region12: #{tpu_custom_call.1} parent=1 // pred_region
      %s39 = ssub.s32 16, 16
      %40 = vsyncadd [#allocation6], %s39
      %s42 = sshll.u32 [#allocation7], 4
      %s43 = int_to_ptr.vmem [resolvable:$true] %s42
      %45 = dma.hbm_to_vmem [thread:$0]  %s2, 16, %s43, [#allocation6]
    $region13: #{tpu_custom_call.1} parent=1 // pred_fallthru
      _
    // Predicated region
    $region14: #{tpu_custom_call.1} parent=1 // pred_check
      _
    $region15: #{tpu_custom_call.1} parent=1 // pred_check_branch
      %47 = sbr.rel (0) target = $region17
    $region16: #{tpu_custom_call.1} parent=1 // pred_region
      %s49 = ssub.s32 512, 512
      %50 = vsyncadd [#allocation9], %s49
      %s51 = sshll.u32 [#allocation8], 4
      %s52 = int_to_ptr.vmem [resolvable:$true] %s51
      %57 = dma.hbm_to_vmem [thread:$0]  %s3, 512, %s52, [#allocation9], 128, 128, 8
    $region17: #{tpu_custom_call.1} parent=1 // pred_fallthru
      _
    // Predicated region
    $region18: #{tpu_custom_call.1} parent=1 // pred_check
      _
    $region19: #{tpu_custom_call.1} parent=1 // pred_check_branch
      %59 = sbr.rel (0) target = $region21
    $region20: #{tpu_custom_call.1} parent=1 // pred_region
      %s61 = ssub.s32 16, 16
      %62 = vsyncadd [#allocation9], %s61
      %s64 = sshll.u32 [#allocation10], 4
      %s65 = int_to_ptr.vmem [resolvable:$true] %s64
      %67 = dma.hbm_to_vmem [thread:$0]  %s4, 16, %s65, [#allocation9]
    $region21: #{tpu_custom_call.1} parent=1 // pred_fallthru
      _
    // Predicated region
    $region22: #{tpu_custom_call.1} parent=1 // pred_check
      _
    $region23: #{tpu_custom_call.1} parent=1 // pred_check_branch
      %69 = sbr.rel (0) target = $region25
    $region24: #{tpu_custom_call.1} parent=1 // pred_region
      %70 = dma.done [#allocation3], 1024
    $region25: #{tpu_custom_call.1} parent=1 // pred_fallthru
      _
    // Predicated region
    $region26: #{tpu_custom_call.1} parent=1 // pred_check
      _
    $region27: #{tpu_custom_call.1} parent=1 // pred_check_branch
      %72 = sbr.rel (0) target = $region29
    $region28: #{tpu_custom_call.1} parent=1 // pred_region
      %73 = dma.done [#allocation6], 16000
    $region29: #{tpu_custom_call.1} parent=1 // pred_fallthru
      _
    // Predicated region
    $region30: #{tpu_custom_call.1} parent=1 // pred_check
      _
    $region31: #{tpu_custom_call.1} parent=1 // pred_check_branch
      %75 = sbr.rel (0) target = $region33
    $region32: #{tpu_custom_call.1} parent=1 // pred_region
      %76 = dma.done [#allocation6], 16
    $region33: #{tpu_custom_call.1} parent=1 // pred_fallthru
      _
    // Predicated region
    $region34: #{tpu_custom_call.1} parent=1 // pred_check
      _
    $region35: #{tpu_custom_call.1} parent=1 // pred_check_branch
      %78 = sbr.rel (0) target = $region37
    $region36: #{tpu_custom_call.1} parent=1 // pred_region
      %79 = dma.done [#allocation9], 512
    $region37: #{tpu_custom_call.1} parent=1 // pred_fallthru
      _
    // Predicated region
    $region38: #{tpu_custom_call.1} parent=1 // pred_check
      _
    $region39: #{tpu_custom_call.1} parent=1 // pred_check_branch
      %81 = sbr.rel (0) target = $region41
    $region40: #{tpu_custom_call.1} parent=1 // pred_region
      %82 = dma.done [#allocation9], 16
    $region41: #{tpu_custom_call.1} parent=1 // pred_fallthru
      _
    %v83 = vld [vmem:[#allocation2] sm:$0xff]
    %v84 = vld [vmem:[#allocation2 + $0x8] sm:$0xff]
    %v85 = vld [vmem:[#allocation2 + $0x10] sm:$0xff]
    %v86 = vld [vmem:[#allocation2 + $0x18] sm:$0xff]
    %v87 = vld [vmem:[#allocation2 + $0x20] sm:$0xff]
    %v88 = vld [vmem:[#allocation2 + $0x28] sm:$0xff]
    %v89 = vld [vmem:[#allocation2 + $0x30] sm:$0xff]
    %v90 = vld [vmem:[#allocation2 + $0x38] sm:$0xff]
    %v91 = vld [vmem:[#allocation5] sm:$0xff]
    %v92 = vld [vmem:[#allocation5 + $0x8] sm:$0xff]
    %v93 = vld [vmem:[#allocation5 + $0x10] sm:$0xff]
    %v94 = vld [vmem:[#allocation5 + $0x18] sm:$0xff]
    %v95 = vld [vmem:[#allocation5 + $0x20] sm:$0xff]
    %v96 = vld [vmem:[#allocation5 + $0x28] sm:$0xff]
    %v97 = vld [vmem:[#allocation5 + $0x30] sm:$0xff]
    %v98 = vld [vmem:[#allocation5 + $0x38] sm:$0xff]
    %v99 = vld [vmem:[#allocation5 + $0x40] sm:$0xff]
    %v100 = vld [vmem:[#allocation5 + $0x48] sm:$0xff]
    %v101 = vld [vmem:[#allocation5 + $0x50] sm:$0xff]
    %v102 = vld [vmem:[#allocation5 + $0x58] sm:$0xff]
    %v103 = vld [vmem:[#allocation5 + $0x60] sm:$0xff]
    %v104 = vld [vmem:[#allocation5 + $0x68] sm:$0xff]
    %v105 = vld [vmem:[#allocation5 + $0x70] sm:$0xff]
    %v106 = vld [vmem:[#allocation5 + $0x78] sm:$0xff]
    %v107 = vld [vmem:[#allocation5 + $0x80] sm:$0xff]
    %v108 = vld [vmem:[#allocation5 + $0x88] sm:$0xff]
    %v109 = vld [vmem:[#allocation5 + $0x90] sm:$0xff]
    %v110 = vld [vmem:[#allocation5 + $0x98] sm:$0xff]
    %v111 = vld [vmem:[#allocation5 + $0xa0] sm:$0xff]
    %v112 = vld [vmem:[#allocation5 + $0xa8] sm:$0xff]
    %v113 = vld [vmem:[#allocation5 + $0xb0] sm:$0xff]
    %v114 = vld [vmem:[#allocation5 + $0xb8] sm:$0xff]
    %v115 = vld [vmem:[#allocation5 + $0xc0] sm:$0xff]
    %v116 = vld [vmem:[#allocation5 + $0xc8] sm:$0xff]
    %v117 = vld [vmem:[#allocation5 + $0xd0] sm:$0xff]
    %v118 = vld [vmem:[#allocation5 + $0xd8] sm:$0xff]
    %v119 = vld [vmem:[#allocation5 + $0xe0] sm:$0xff]
    %v120 = vld [vmem:[#allocation5 + $0xe8] sm:$0xff]
    %v121 = vld [vmem:[#allocation5 + $0xf0] sm:$0xff]
    %v122 = vld [vmem:[#allocation5 + $0xf8] sm:$0xff]
    %v123 = vld [vmem:[#allocation5 + $0x100] sm:$0xff]
    %v124 = vld [vmem:[#allocation5 + $0x108] sm:$0xff]
    %v125 = vld [vmem:[#allocation5 + $0x110] sm:$0xff]
    %v126 = vld [vmem:[#allocation5 + $0x118] sm:$0xff]
    %v127 = vld [vmem:[#allocation5 + $0x120] sm:$0xff]
    %v128 = vld [vmem:[#allocation5 + $0x128] sm:$0xff]
    %v129 = vld [vmem:[#allocation5 + $0x130] sm:$0xff]
    %v130 = vld [vmem:[#allocation5 + $0x138] sm:$0xff]
    %v131 = vld [vmem:[#allocation5 + $0x140] sm:$0xff]
    %v132 = vld [vmem:[#allocation5 + $0x148] sm:$0xff]
    %v133 = vld [vmem:[#allocation5 + $0x150] sm:$0xff]
    %v134 = vld [vmem:[#allocation5 + $0x158] sm:$0xff]
    %v135 = vld [vmem:[#allocation5 + $0x160] sm:$0xff]
    %v136 = vld [vmem:[#allocation5 + $0x168] sm:$0xff]
    %v137 = vld [vmem:[#allocation5 + $0x170] sm:$0xff]
    %v138 = vld [vmem:[#allocation5 + $0x178] sm:$0xff]
    %v139 = vld [vmem:[#allocation5 + $0x180] sm:$0xff]
    %v140 = vld [vmem:[#allocation5 + $0x188] sm:$0xff]
    %v141 = vld [vmem:[#allocation5 + $0x190] sm:$0xff]
    %v142 = vld [vmem:[#allocation5 + $0x198] sm:$0xff]
    %v143 = vld [vmem:[#allocation5 + $0x1a0] sm:$0xff]
    %v144 = vld [vmem:[#allocation5 + $0x1a8] sm:$0xff]
    %v145 = vld [vmem:[#allocation5 + $0x1b0] sm:$0xff]
    %v146 = vld [vmem:[#allocation5 + $0x1b8] sm:$0xff]
    %v147 = vld [vmem:[#allocation5 + $0x1c0] sm:$0xff]
    %v148 = vld [vmem:[#allocation5 + $0x1c8] sm:$0xff]
    %v149 = vld [vmem:[#allocation5 + $0x1d0] sm:$0xff]
    %v150 = vld [vmem:[#allocation5 + $0x1d8] sm:$0xff]
    %v151 = vld [vmem:[#allocation5 + $0x1e0] sm:$0xff]
    %v152 = vld [vmem:[#allocation5 + $0x1e8] sm:$0xff]
    %v153 = vld [vmem:[#allocation5 + $0x1f0] sm:$0xff]
    %v154 = vld [vmem:[#allocation5 + $0x1f8] sm:$0xff]
    %v155 = vld [vmem:[#allocation5 + $0x200] sm:$0xff]
    %v156 = vld [vmem:[#allocation5 + $0x208] sm:$0xff]
    %v157 = vld [vmem:[#allocation5 + $0x210] sm:$0xff]
    %v158 = vld [vmem:[#allocation5 + $0x218] sm:$0xff]
    %v159 = vld [vmem:[#allocation5 + $0x220] sm:$0xff]
    %v160 = vld [vmem:[#allocation5 + $0x228] sm:$0xff]
    %v161 = vld [vmem:[#allocation5 + $0x230] sm:$0xff]
    %v162 = vld [vmem:[#allocation5 + $0x238] sm:$0xff]
    %v163 = vld [vmem:[#allocation5 + $0x240] sm:$0xff]
    %v164 = vld [vmem:[#allocation5 + $0x248] sm:$0xff]
    %v165 = vld [vmem:[#allocation5 + $0x250] sm:$0xff]
    %v166 = vld [vmem:[#allocation5 + $0x258] sm:$0xff]
    %v167 = vld [vmem:[#allocation5 + $0x260] sm:$0xff]
    %v168 = vld [vmem:[#allocation5 + $0x268] sm:$0xff]
    %v169 = vld [vmem:[#allocation5 + $0x270] sm:$0xff]
    %v170 = vld [vmem:[#allocation5 + $0x278] sm:$0xff]
    %v171 = vld [vmem:[#allocation5 + $0x280] sm:$0xff]
    %v172 = vld [vmem:[#allocation5 + $0x288] sm:$0xff]
    %v173 = vld [vmem:[#allocation5 + $0x290] sm:$0xff]
    %v174 = vld [vmem:[#allocation5 + $0x298] sm:$0xff]
    %v175 = vld [vmem:[#allocation5 + $0x2a0] sm:$0xff]
    %v176 = vld [vmem:[#allocation5 + $0x2a8] sm:$0xff]
    %v177 = vld [vmem:[#allocation5 + $0x2b0] sm:$0xff]
    %v178 = vld [vmem:[#allocation5 + $0x2b8] sm:$0xff]
    %v179 = vld [vmem:[#allocation5 + $0x2c0] sm:$0xff]
    %v180 = vld [vmem:[#allocation5 + $0x2c8] sm:$0xff]
    %v181 = vld [vmem:[#allocation5 + $0x2d0] sm:$0xff]
    %v182 = vld [vmem:[#allocation5 + $0x2d8] sm:$0xff]
    %v183 = vld [vmem:[#allocation5 + $0x2e0] sm:$0xff]
    %v184 = vld [vmem:[#allocation5 + $0x2e8] sm:$0xff]
    %v185 = vld [vmem:[#allocation5 + $0x2f0] sm:$0xff]
    %v186 = vld [vmem:[#allocation5 + $0x2f8] sm:$0xff]
    %v187 = vld [vmem:[#allocation5 + $0x300] sm:$0xff]
    %v188 = vld [vmem:[#allocation5 + $0x308] sm:$0xff]
    %v189 = vld [vmem:[#allocation5 + $0x310] sm:$0xff]
    %v190 = vld [vmem:[#allocation5 + $0x318] sm:$0xff]
    %v191 = vld [vmem:[#allocation5 + $0x320] sm:$0xff]
    %v192 = vld [vmem:[#allocation5 + $0x328] sm:$0xff]
    %v193 = vld [vmem:[#allocation5 + $0x330] sm:$0xff]
    %v194 = vld [vmem:[#allocation5 + $0x338] sm:$0xff]
    %v195 = vld [vmem:[#allocation5 + $0x340] sm:$0xff]
    %v196 = vld [vmem:[#allocation5 + $0x348] sm:$0xff]
    %v197 = vld [vmem:[#allocation5 + $0x350] sm:$0xff]
    %v198 = vld [vmem:[#allocation5 + $0x358] sm:$0xff]
    %v199 = vld [vmem:[#allocation5 + $0x360] sm:$0xff]
    %v200 = vld [vmem:[#allocation5 + $0x368] sm:$0xff]
    %v201 = vld [vmem:[#allocation5 + $0x370] sm:$0xff]
    %v202 = vld [vmem:[#allocation5 + $0x378] sm:$0xff]
    %v203 = vld [vmem:[#allocation5 + $0x380] sm:$0xff]
    %v204 = vld [vmem:[#allocation5 + $0x388] sm:$0xff]
    %v205 = vld [vmem:[#allocation5 + $0x390] sm:$0xff]
    %v206 = vld [vmem:[#allocation5 + $0x398] sm:$0xff]
    %v207 = vld [vmem:[#allocation5 + $0x3a0] sm:$0xff]
    %v208 = vld [vmem:[#allocation5 + $0x3a8] sm:$0xff]
    %v209 = vld [vmem:[#allocation5 + $0x3b0] sm:$0xff]
    %v210 = vld [vmem:[#allocation5 + $0x3b8] sm:$0xff]
    %v211 = vld [vmem:[#allocation5 + $0x3c0] sm:$0xff]
    %v212 = vld [vmem:[#allocation5 + $0x3c8] sm:$0xff]
    %v213 = vld [vmem:[#allocation5 + $0x3d0] sm:$0xff]
    %v214 = vld [vmem:[#allocation5 + $0x3d8] sm:$0xff]
    %v215 = vld [vmem:[#allocation5 + $0x3e0] sm:$0xff]
    %v216 = vld [vmem:[#allocation7] sm:$0x1]
    %v218 = vlaneseq
    %v219 = vshrl.u32 %v218, 7
    %v220 = vsub.s32 0, %v219
    %v221 = vrot.slane %v216, %v220
    %vm223 = vcmask 850944
    %v225 = vsel %vm223, %v90, 0
    %227 = vmatprep.subr.mxu0 0.0
    %228 = vmatpush1.msra.mxu0 %v91
    %229 = vmatprep.subr.mxu0 0.0
    %230 = vmatpush1.msra.mxu0 %v92
    %231 = vmatprep.subr.mxu0 0.0
    %232 = vmatpush1.msra.mxu0 %v93
    %233 = vmatprep.subr.mxu0 0.0
    %234 = vmatpush1.msra.mxu0 %v94
    %235 = vmatprep.subr.mxu0 0.0
    %236 = vmatpush1.msra.mxu0 %v95
    %237 = vmatprep.subr.mxu0 0.0
    %238 = vmatpush1.msra.mxu0 %v96
    %239 = vmatprep.subr.mxu0 0.0
    %240 = vmatpush1.msra.mxu0 %v97
    %241 = vmatprep.subr.mxu0 0.0
    %242 = vmatpush1.msra.mxu0 %v98
    %243 = vmatprep.subr.mxu0 0.0
    %244 = vmatpush1.msra.mxu0 %v99
    %245 = vmatprep.subr.mxu0 0.0
    %246 = vmatpush1.msra.mxu0 %v100
    %247 = vmatprep.subr.mxu0 0.0
    %248 = vmatpush1.msra.mxu0 %v101
    %249 = vmatprep.subr.mxu0 0.0
    %250 = vmatpush1.msra.mxu0 %v102
    %251 = vmatprep.subr.mxu0 0.0
    %252 = vmatpush1.msra.mxu0 %v103
    %253 = vmatprep.subr.mxu0 0.0
    %254 = vmatpush1.msra.mxu0 %v104
    %255 = vmatprep.subr.mxu0 0.0
    %256 = vmatpush1.msra.mxu0 %v105
    %257 = vmatprep.subr.mxu0 0.0
    %258 = vmatpush1.msra.mxu0 %v106
    %259 = vmatprep.subr.mxu0 0.0
    %260 = vmatpush1.msra.mxu0 %v107
    %261 = vmatprep.subr.mxu0 0.0
    %262 = vmatpush1.msra.mxu0 %v108
    %263 = vmatprep.subr.mxu0 0.0
    %264 = vmatpush1.msra.mxu0 %v109
    %265 = vmatprep.subr.mxu0 0.0
    %266 = vmatpush1.msra.mxu0 %v110
    %267 = vmatprep.subr.mxu0 0.0
    %268 = vmatpush1.msra.mxu0 %v111
    %269 = vmatprep.subr.mxu0 0.0
    %270 = vmatpush1.msra.mxu0 %v112
    %271 = vmatprep.subr.mxu0 0.0
    %272 = vmatpush1.msra.mxu0 %v113
    %273 = vmatprep.subr.mxu0 0.0
    %274 = vmatpush1.msra.mxu0 %v114
    %275 = vmatprep.subr.mxu0 0.0
    %276 = vmatpush1.msra.mxu0 %v115
    %277 = vmatprep.subr.mxu0 0.0
    %278 = vmatpush1.msra.mxu0 %v116
    %279 = vmatprep.subr.mxu0 0.0
    %280 = vmatpush1.msra.mxu0 %v117
    %281 = vmatprep.subr.mxu0 0.0
    %282 = vmatpush1.msra.mxu0 %v118
    %283 = vmatprep.subr.mxu0 0.0
    %284 = vmatpush1.msra.mxu0 %v119
    %285 = vmatprep.subr.mxu0 0.0
    %286 = vmatpush1.msra.mxu0 %v120
    %287 = vmatprep.subr.mxu0 0.0
    %288 = vmatpush1.msra.mxu0 %v121
    %289 = vmatprep.subr.mxu0 0.0
    %290 = vmatpush1.msra.mxu0 %v122
    %291 = vmatprep.mubr.f32.mxu0 %v84
    %292 = vmatmul.mubr.f32.gmra.mrb[0].mxu0 %v83
    %v293 = vpop.f32.mrb[0].mxu0
    %v294 = vadd.f32 %v221, %v293
    %v295 = vpop.f32.mrb[0].mxu0
    %296 = vdwg.mxu0
    %297 = vmatprep.subr.mxu0 0.0
    %298 = vmatpush1.msra.mxu0 %v123
    %299 = vmatprep.subr.mxu0 0.0
    %300 = vmatpush1.msra.mxu0 %v124
    %301 = vmatprep.subr.mxu0 0.0
    %302 = vmatpush1.msra.mxu0 %v125
    %303 = vmatprep.subr.mxu0 0.0
    %304 = vmatpush1.msra.mxu0 %v126
    %305 = vmatprep.subr.mxu0 0.0
    %306 = vmatpush1.msra.mxu0 %v127
    %307 = vmatprep.subr.mxu0 0.0
    %308 = vmatpush1.msra.mxu0 %v128
    %309 = vmatprep.subr.mxu0 0.0
    %310 = vmatpush1.msra.mxu0 %v129
    %311 = vmatprep.subr.mxu0 0.0
    %312 = vmatpush1.msra.mxu0 %v130
    %313 = vmatprep.subr.mxu0 0.0
    %314 = vmatpush1.msra.mxu0 %v131
    %315 = vmatprep.subr.mxu0 0.0
    %316 = vmatpush1.msra.mxu0 %v132
    %317 = vmatprep.subr.mxu0 0.0
    %318 = vmatpush1.msra.mxu0 %v133
    %319 = vmatprep.subr.mxu0 0.0
    %320 = vmatpush1.msra.mxu0 %v134
    %321 = vmatprep.subr.mxu0 0.0
    %322 = vmatpush1.msra.mxu0 %v135
    %323 = vmatprep.subr.mxu0 0.0
    %324 = vmatpush1.msra.mxu0 %v136
    %325 = vmatprep.subr.mxu0 0.0
    %326 = vmatpush1.msra.mxu0 %v137
    %327 = vmatprep.subr.mxu0 0.0
    %328 = vmatpush1.msra.mxu0 %v138
    %329 = vmatprep.subr.mxu0 0.0
    %330 = vmatpush1.msra.mxu0 %v139
    %331 = vmatprep.subr.mxu0 0.0
    %332 = vmatpush1.msra.mxu0 %v140
    %333 = vmatprep.subr.mxu0 0.0
    %334 = vmatpush1.msra.mxu0 %v141
    %335 = vmatprep.subr.mxu0 0.0
    %336 = vmatpush1.msra.mxu0 %v142
    %337 = vmatprep.subr.mxu0 0.0
    %338 = vmatpush1.msra.mxu0 %v143
    %339 = vmatprep.subr.mxu0 0.0
    %340 = vmatpush1.msra.mxu0 %v144
    %341 = vmatprep.subr.mxu0 0.0
    %342 = vmatpush1.msra.mxu0 %v145
    %343 = vmatprep.subr.mxu0 0.0
    %344 = vmatpush1.msra.mxu0 %v146
    %345 = vmatprep.subr.mxu0 0.0
    %346 = vmatpush1.msra.mxu0 %v147
    %347 = vmatprep.subr.mxu0 0.0
    %348 = vmatpush1.msra.mxu0 %v148
    %349 = vmatprep.subr.mxu0 0.0
    %350 = vmatpush1.msra.mxu0 %v149
    %351 = vmatprep.subr.mxu0 0.0
    %352 = vmatpush1.msra.mxu0 %v150
    %353 = vmatprep.subr.mxu0 0.0
    %354 = vmatpush1.msra.mxu0 %v151
    %355 = vmatprep.subr.mxu0 0.0
    %356 = vmatpush1.msra.mxu0 %v152
    %357 = vmatprep.subr.mxu0 0.0
    %358 = vmatpush1.msra.mxu0 %v153
    %359 = vmatprep.subr.mxu0 0.0
    %360 = vmatpush1.msra.mxu0 %v154
    %361 = vmatprep.mubr.f32.mxu0 %v86
    %362 = vmatmul.mubr.f32.gmra.mrb[0].mxu0 %v85
    %v363 = vpop.f32.mrb[0].mxu0
    %v364 = vadd.f32 %v294, %v363
    %v365 = vpop.f32.mrb[0].mxu0
    %366 = vdwg.mxu0
    %367 = vmatprep.subr.mxu0 0.0
    %368 = vmatpush1.msra.mxu0 %v155
    %369 = vmatprep.subr.mxu0 0.0
    %370 = vmatpush1.msra.mxu0 %v156
    %371 = vmatprep.subr.mxu0 0.0
    %372 = vmatpush1.msra.mxu0 %v157
    %373 = vmatprep.subr.mxu0 0.0
    %374 = vmatpush1.msra.mxu0 %v158
    %375 = vmatprep.subr.mxu0 0.0
    %376 = vmatpush1.msra.mxu0 %v159
    %377 = vmatprep.subr.mxu0 0.0
    %378 = vmatpush1.msra.mxu0 %v160
    %379 = vmatprep.subr.mxu0 0.0
    %380 = vmatpush1.msra.mxu0 %v161
    %381 = vmatprep.subr.mxu0 0.0
    %382 = vmatpush1.msra.mxu0 %v162
    %383 = vmatprep.subr.mxu0 0.0
    %384 = vmatpush1.msra.mxu0 %v163
    %385 = vmatprep.subr.mxu0 0.0
    %386 = vmatpush1.msra.mxu0 %v164
    %387 = vmatprep.subr.mxu0 0.0
    %388 = vmatpush1.msra.mxu0 %v165
    %389 = vmatprep.subr.mxu0 0.0
    %390 = vmatpush1.msra.mxu0 %v166
    %391 = vmatprep.subr.mxu0 0.0
    %392 = vmatpush1.msra.mxu0 %v167
    %393 = vmatprep.subr.mxu0 0.0
    %394 = vmatpush1.msra.mxu0 %v168
    %395 = vmatprep.subr.mxu0 0.0
    %396 = vmatpush1.msra.mxu0 %v169
    %397 = vmatprep.subr.mxu0 0.0
    %398 = vmatpush1.msra.mxu0 %v170
    %399 = vmatprep.subr.mxu0 0.0
    %400 = vmatpush1.msra.mxu0 %v171
    %401 = vmatprep.subr.mxu0 0.0
    %402 = vmatpush1.msra.mxu0 %v172
    %403 = vmatprep.subr.mxu0 0.0
    %404 = vmatpush1.msra.mxu0 %v173
    %405 = vmatprep.subr.mxu0 0.0
    %406 = vmatpush1.msra.mxu0 %v174
    %407 = vmatprep.subr.mxu0 0.0
    %408 = vmatpush1.msra.mxu0 %v175
    %409 = vmatprep.subr.mxu0 0.0
    %410 = vmatpush1.msra.mxu0 %v176
    %411 = vmatprep.subr.mxu0 0.0
    %412 = vmatpush1.msra.mxu0 %v177
    %413 = vmatprep.subr.mxu0 0.0
    %414 = vmatpush1.msra.mxu0 %v178
    %415 = vmatprep.subr.mxu0 0.0
    %416 = vmatpush1.msra.mxu0 %v179
    %417 = vmatprep.subr.mxu0 0.0
    %418 = vmatpush1.msra.mxu0 %v180
    %419 = vmatprep.subr.mxu0 0.0
    %420 = vmatpush1.msra.mxu0 %v181
    %421 = vmatprep.subr.mxu0 0.0
    %422 = vmatpush1.msra.mxu0 %v182
    %423 = vmatprep.subr.mxu0 0.0
    %424 = vmatpush1.msra.mxu0 %v183
    %425 = vmatprep.subr.mxu0 0.0
    %426 = vmatpush1.msra.mxu0 %v184
    %427 = vmatprep.subr.mxu0 0.0
    %428 = vmatpush1.msra.mxu0 %v185
    %429 = vmatprep.subr.mxu0 0.0
    %430 = vmatpush1.msra.mxu0 %v186
    %431 = vmatprep.mubr.f32.mxu0 %v88
    %432 = vmatmul.mubr.f32.gmra.mrb[0].mxu0 %v87
    %v433 = vpop.f32.mrb[0].mxu0
    %v434 = vadd.f32 %v364, %v433
    %v435 = vpop.f32.mrb[0].mxu0
    %436 = vdwg.mxu0
    %437 = vmatprep.subr.mxu0 0.0
    %438 = vmatpush1.msra.mxu0 %v187
    %439 = vmatprep.subr.mxu0 0.0
    %440 = vmatpush1.msra.mxu0 %v188
    %441 = vmatprep.subr.mxu0 0.0
    %442 = vmatpush1.msra.mxu0 %v189
    %443 = vmatprep.subr.mxu0 0.0
    %444 = vmatpush1.msra.mxu0 %v190
    %445 = vmatprep.subr.mxu0 0.0
    %446 = vmatpush1.msra.mxu0 %v191
    %447 = vmatprep.subr.mxu0 0.0
    %448 = vmatpush1.msra.mxu0 %v192
    %449 = vmatprep.subr.mxu0 0.0
    %450 = vmatpush1.msra.mxu0 %v193
    %451 = vmatprep.subr.mxu0 0.0
    %452 = vmatpush1.msra.mxu0 %v194
    %453 = vmatprep.subr.mxu0 0.0
    %454 = vmatpush1.msra.mxu0 %v195
    %455 = vmatprep.subr.mxu0 0.0
    %456 = vmatpush1.msra.mxu0 %v196
    %457 = vmatprep.subr.mxu0 0.0
    %458 = vmatpush1.msra.mxu0 %v197
    %459 = vmatprep.subr.mxu0 0.0
    %460 = vmatpush1.msra.mxu0 %v198
    %461 = vmatprep.subr.mxu0 0.0
    %462 = vmatpush1.msra.mxu0 %v199
    %463 = vmatprep.subr.mxu0 0.0
    %464 = vmatpush1.msra.mxu0 %v200
    %465 = vmatprep.subr.mxu0 0.0
    %466 = vmatpush1.msra.mxu0 %v201
    %467 = vmatprep.subr.mxu0 0.0
    %468 = vmatpush1.msra.mxu0 %v202
    %469 = vmatprep.subr.mxu0 0.0
    %470 = vmatpush1.msra.mxu0 %v203
    %471 = vmatprep.subr.mxu0 0.0
    %472 = vmatpush1.msra.mxu0 %v204
    %473 = vmatprep.subr.mxu0 0.0
    %474 = vmatpush1.msra.mxu0 %v205
    %475 = vmatprep.subr.mxu0 0.0
    %476 = vmatpush1.msra.mxu0 %v206
    %477 = vmatprep.subr.mxu0 0.0
    %478 = vmatpush1.msra.mxu0 %v207
    %479 = vmatprep.subr.mxu0 0.0
    %480 = vmatpush1.msra.mxu0 %v208
    %481 = vmatprep.subr.mxu0 0.0
    %482 = vmatpush1.msra.mxu0 %v209
    %483 = vmatprep.subr.mxu0 0.0
    %484 = vmatpush1.msra.mxu0 %v210
    %485 = vmatprep.subr.mxu0 0.0
    %486 = vmatpush1.msra.mxu0 %v211
    %487 = vmatprep.subr.mxu0 0.0
    %488 = vmatpush1.msra.mxu0 %v212
    %489 = vmatprep.subr.mxu0 0.0
    %490 = vmatpush1.msra.mxu0 %v213
    %491 = vmatprep.subr.mxu0 0.0
    %492 = vmatpush1.msra.mxu0 %v214
    %493 = vmatprep.subr.mxu0 0.0
    %494 = vmatpush1.msra.mxu0 %v215
    %495 = vmatprep.subr.mxu0 0.0
    %496 = vmatpush1.msra.mxu0 0.0
    %497 = vmatprep.subr.mxu0 0.0
    %498 = vmatpush1.msra.mxu0 0.0
    %499 = vmatprep.subr.mxu0 0.0
    %500 = vmatpush1.msra.mxu0 0.0
    %501 = vmatprep.mubr.f32.mxu0 %v225
    %502 = vmatmul.mubr.f32.gmra.mrb[0].mxu0 %v89
    %v503 = vpop.f32.mrb[0].mxu0
    %v504 = vadd.f32 %v434, %v503
    %v505 = vpop.f32.mrb[0].mxu0
    %506 = vdwg.mxu0
    %v507 = vmax.f32 %v504, 0.0
    %v508 = vld [vmem:[#allocation8] sm:$0xff]
    %v509 = vld [vmem:[#allocation8 + $0x8] sm:$0xff]
    %v510 = vld [vmem:[#allocation8 + $0x10] sm:$0xff]
    %v511 = vld [vmem:[#allocation8 + $0x18] sm:$0xff]
    %v512 = vld [vmem:[#allocation10] sm:$0x1]
    %v514 = vlaneseq
    %v515 = vshrl.u32 %v514, 7
    %v516 = vsub.s32 0, %v515
    %v517 = vrot.slane %v512, %v516
    %vm519 = vcmask 261120
    %v521 = vsel %vm519, %v507, 0
    %523 = vmatprep.subr.mxu0 0.0
    %524 = vmatpush1.msra.mxu0 %v508
    %525 = vmatprep.subr.mxu0 0.0
    %526 = vmatpush1.msra.mxu0 %v509
    %527 = vmatprep.subr.mxu0 0.0
    %528 = vmatpush1.msra.mxu0 %v510
    %529 = vmatprep.subr.mxu0 0.0
    %530 = vmatpush1.msra.mxu0 %v511
    %531 = vmatprep.subr.mxu0 0.0
    %532 = vmatpush1.msra.mxu0 0.0
    %533 = vmatprep.subr.mxu0 0.0
    %534 = vmatpush1.msra.mxu0 0.0
    %535 = vmatprep.subr.mxu0 0.0
    %536 = vmatpush1.msra.mxu0 0.0
    %537 = vmatprep.subr.mxu0 0.0
    %538 = vmatpush1.msra.mxu0 0.0
    %539 = vmatprep.subr.mxu0 0.0
    %540 = vmatpush1.msra.mxu0 0.0
    %541 = vmatprep.subr.mxu0 0.0
    %542 = vmatpush1.msra.mxu0 0.0
    %543 = vmatprep.subr.mxu0 0.0
    %544 = vmatpush1.msra.mxu0 0.0
    %545 = vmatprep.subr.mxu0 0.0
    %546 = vmatpush1.msra.mxu0 0.0
    %547 = vmatprep.subr.mxu0 0.0
    %548 = vmatpush1.msra.mxu0 0.0
    %549 = vmatprep.subr.mxu0 0.0
    %550 = vmatpush1.msra.mxu0 0.0
    %551 = vmatprep.subr.mxu0 0.0
    %552 = vmatpush1.msra.mxu0 0.0
    %553 = vmatprep.subr.mxu0 0.0
    %554 = vmatpush1.msra.mxu0 0.0
    %555 = vmatprep.subr.mxu0 0.0
    %556 = vmatpush1.msra.mxu0 0.0
    %557 = vmatprep.subr.mxu0 0.0
    %558 = vmatpush1.msra.mxu0 0.0
    %559 = vmatprep.subr.mxu0 0.0
    %560 = vmatpush1.msra.mxu0 0.0
    %561 = vmatprep.subr.mxu0 0.0
    %562 = vmatpush1.msra.mxu0 0.0
    %563 = vmatprep.subr.mxu0 0.0
    %564 = vmatpush1.msra.mxu0 0.0
    %565 = vmatprep.subr.mxu0 0.0
    %566 = vmatpush1.msra.mxu0 0.0
    %567 = vmatprep.subr.mxu0 0.0
    %568 = vmatpush1.msra.mxu0 0.0
    %569 = vmatprep.subr.mxu0 0.0
    %570 = vmatpush1.msra.mxu0 0.0
    %571 = vmatprep.subr.mxu0 0.0
    %572 = vmatpush1.msra.mxu0 0.0
    %573 = vmatprep.subr.mxu0 0.0
    %574 = vmatpush1.msra.mxu0 0.0
    %575 = vmatprep.subr.mxu0 0.0
    %576 = vmatpush1.msra.mxu0 0.0
    %577 = vmatprep.subr.mxu0 0.0
    %578 = vmatpush1.msra.mxu0 0.0
    %579 = vmatprep.subr.mxu0 0.0
    %580 = vmatpush1.msra.mxu0 0.0
    %581 = vmatprep.subr.mxu0 0.0
    %582 = vmatpush1.msra.mxu0 0.0
    %583 = vmatprep.subr.mxu0 0.0
    %584 = vmatpush1.msra.mxu0 0.0
    %585 = vmatprep.subr.mxu0 0.0
    %586 = vmatpush1.msra.mxu0 0.0
    %587 = vmatprep.mubr.f32.mxu0 0.0
    %588 = vmatmul.mubr.f32.gmra.mrb[0].mxu0 %v521
    %v589 = vpop.f32.mrb[0].mxu0
    %v590 = vadd.f32 %v517, %v589
    %v591 = vpop.f32.mrb[0].mxu0
    %592 = vdwg.mxu0
    %vm593 = vcmask 15360
    %594 = vst.msk [vmem:[#allocation11] sm:$0xff] %vm593, %v590
    // Predicated region
    $region42: #{tpu_custom_call.1} parent=1 // pred_check
      _
    $region43: #{tpu_custom_call.1} parent=1 // pred_check_branch
      %596 = sbr.rel (0) target = $region45
    $region44: #{tpu_custom_call.1} parent=1 // pred_region
      %s598 = ssub.s32 128, 128
      %599 = vsyncadd [#allocation4], %s598
      %s601 = sshll.u32 [#allocation11], 4
      %s602 = int_to_ptr.vmem [resolvable:$true] %s601
      %604 = dma.vmem_to_hbm [thread:$0]  %s602, 128, %s5, [#allocation4]
    $region45: #{tpu_custom_call.1} parent=1 // pred_fallthru
      _
    // Predicated region
    $region46: #{tpu_custom_call.1} parent=1 // pred_check
      _
    $region47: #{tpu_custom_call.1} parent=1 // pred_check_branch
      %606 = sbr.rel (0) target = $region49
    $region48: #{tpu_custom_call.1} parent=1 // pred_region
      %607 = dma.done [#allocation4], 128
    $region49: #{tpu_custom_call.1} parent=1 // pred_fallthru
      _
    %608 = vsyncpa [#allocation3], 1
    %609 = vsyncpa [#allocation6], 1
    %610 = vsyncpa [#allocation9], 1
    %611 = vsyncpa [#allocation4], 1

</llo_original>
